<compile_context>
chip_gen: v6e
topology: v6e:2x2x1
jax: 0.10.0
libtpu: 0.0.40
codegen_flags: <defaults>
</compile_context>

<pallas_src>
import jax
import jax.numpy as jnp
from jax.experimental import pallas as pl
from jax.experimental.pallas import tpu as pltpu

C = 3  # RGB


def _pick_tile_lanes(hw, n, max_lanes=64 * 1024, min_steps=8, min_lanes=4096):
    """Largest multiple-of-128 divisor of hw that is <= max_lanes, preferring
    the largest one that still yields >= min_steps total grid steps (so both
    v7x TensorCores get several steps and double-buffering can overlap).
    Tiles are never shrunk below min_lanes just to manufacture steps."""
    if hw % 128 != 0:
        return hw  # defensive only; the wrapper pads hw to a multiple of 128
    largest = None
    for k in range(hw // 128, 0, -1):
        tl = 128 * k
        if hw % tl or tl > max_lanes:
            continue
        if largest is None:
            largest = tl                       # largest feasible tile
        if n * (hw // tl) >= min_steps:
            return tl if tl >= min_lanes else largest
    return largest if largest is not None else hw


def _pick_row_block(rows, max_rows=2048):
    """Row block for the (rows, 128) normalize pass: full array if small, else
    the largest multiple-of-8 divisor <= max_rows (None -> pure-JAX fallback)."""
    if rows <= max_rows:
        return rows                            # single whole-array block (legal)
    for t in range(max_rows - max_rows % 8, 7, -8):
        if rows % t == 0:
            return t
    return None


def _head_kernel(w_ref, b_ref, x_ref, sal_ref, bmin_ref, bmax_ref):
    """Fused (ImageNet-normalize + 1x1 saliency head) + per-tile min/max.

    w_ref   : (C,) SMEM  -- folded weights  head_w / image_std
    b_ref   : (1,) SMEM  -- folded bias
    x_ref   : (1, C, TL) VMEM block of the flattened input (original dtype)
    sal_ref : (1, 1, TL) VMEM block of the flattened saliency map (f32)
    bmin_ref: (1, 1, 1, 128) VMEM block -- per-tile min, lane-broadcast
    bmax_ref: (1, 1, 1, 128) VMEM block -- per-tile max, lane-broadcast
    """
    f32 = jnp.float32
    x = x_ref[0]                                           # (C, TL)
    acc = (w_ref[0] * x[0].astype(f32)
           + w_ref[1] * x[1].astype(f32)
           + w_ref[2] * x[2].astype(f32)
           + b_ref[0])                                     # (TL,) f32
    row = acc[None, :]                                     # (1, TL)
    sal_ref[0] = row
    bmin_ref[0, 0] = jnp.broadcast_to(jnp.min(row, axis=1, keepdims=True), (1, 128))
    bmax_ref[0, 0] = jnp.broadcast_to(jnp.max(row, axis=1, keepdims=True), (1, 128))


def _normalize_kernel(mn_ref, scale_ref, y_ref, o_ref):
    """Global min/max normalize: out = (y - mn) * scale, scalars from SMEM."""
    o_ref[...] = (y_ref[...] - mn_ref[0]) * scale_ref[0]


def gcagc_cosal_forward(x, head_w, head_b, image_mean, image_std):
    N, Cin, H, W = x.shape
    assert Cin == C
    HW = H * W
    f32 = jnp.float32

    # ---- Fold ImageNet normalization into the 1x1 head (pure JAX, once).
    w_eff = head_w.astype(f32) / image_std.astype(f32)                     # (C,)
    b_eff = head_b.astype(f32) - jnp.sum(w_eff * image_mean.astype(f32))   # (1,)

    # ---- Lane-dense layout; keep the original input dtype (cast in-kernel).
    x_flat = x.reshape(N, C, HW)
    pad = (-HW) % 128
    if pad:
        # Edge-replicate real pixel values so min/max are unaffected; avoids
        # the TL = HW full-row fallback that can blow scoped VMEM on v5e.
        x_flat = jnp.pad(x_flat, ((0, 0), (0, 0), (0, pad)), mode="edge")
    HWp = HW + pad

    TL = _pick_tile_lanes(HWp, N)
    num_tiles = HWp // TL

    smem_spec = pl.BlockSpec(memory_space=pltpu.MemorySpace.SMEM)

    # ---- Stage 1: fused affine head + per-tile min/max, grid (batch, tile).
    sal, bmin, bmax = pl.pallas_call(
        _head_kernel,
        out_shape=(jax.ShapeDtypeStruct((N, 1, HWp), f32),
                   jax.ShapeDtypeStruct((N, num_tiles, 1, 128), f32),
                   jax.ShapeDtypeStruct((N, num_tiles, 1, 128), f32)),
        grid_spec=pltpu.PrefetchScalarGridSpec(
            num_scalar_prefetch=0,
            grid=(N, num_tiles),
            in_specs=[smem_spec, smem_spec,
                      pl.BlockSpec((1, C, TL), lambda n, t: (n, 0, t))],
            out_specs=[pl.BlockSpec((1, 1, TL), lambda n, t: (n, 0, t)),
                       pl.BlockSpec((1, 1, 1, 128), lambda n, t: (n, t, 0, 0)),
                       pl.BlockSpec((1, 1, 1, 128), lambda n, t: (n, t, 0, 0))]),
        compiler_params=pltpu.CompilerParams(
            dimension_semantics=("parallel", "parallel")),
    )(w_eff, b_eff, x_flat)

    # ---- Tiny global reduce over per-tile stats (N*num_tiles values, not N*HW).
    mn = jnp.min(bmin)
    mx = jnp.max(bmax)                       # max(sal - mn) == max(sal) - mn
    scale = 1.0 / (mx - mn + 1e-8)           # single scalar reciprocal
    mn_arr = jnp.reshape(mn, (1,)).astype(f32)
    scale_arr = jnp.reshape(scale, (1,)).astype(f32)

    # ---- Stage 2: sublane/lane-dense normalize over a (rows, 128) view.
    rows = (N * HWp) // 128                  # HWp % 128 == 0 by construction
    sal2d = sal.reshape(rows, 128)           # metadata-only reshape
    sb = _pick_row_block(rows)
    if sb is None:
        # Rare shape with no usable row divisor: single fused XLA elementwise op.
        out2d = (sal2d - mn) * scale
    else:
        out2d = pl.pallas_call(
            _normalize_kernel,
            out_shape=jax.ShapeDtypeStruct((rows, 128), f32),
            grid_spec=pltpu.PrefetchScalarGridSpec(
                num_scalar_prefetch=0,
                grid=(rows // sb,),
                in_specs=[smem_spec, smem_spec,
                          pl.BlockSpec((sb, 128), lambda i: (i, 0))],
                out_specs=pl.BlockSpec((sb, 128), lambda i: (i, 0))),
            compiler_params=pltpu.CompilerParams(
                dimension_semantics=("parallel",)),
            input_output_aliases={2: 0},     # normalize sal in place
        )(mn_arr, scale_arr, sal2d)

    # cosal.unsqueeze_(dim=1) -> (N, 1, H, W); drop the lane padding.
    out = out2d.reshape(N, HWp)[:, :HW]
    return out.reshape(N, 1, H, W)


def _reference_forward(x, head_w, head_b, image_mean, image_std):
    xn = (x - image_mean[None, :, None, None]) / image_std[None, :, None, None]
    sal = jnp.einsum("nchw,c->nhw", xn, head_w) + head_b[0]
    sal = sal[:, None, :, :]
    shifted = sal - jnp.min(sal)
    return shifted / (jnp.max(shifted) + 1e-8)


if __name__ == "__main__":
    key = jax.random.PRNGKey(0)
    x = jax.random.uniform(key, (2, C, 16, 16), dtype=jnp.float32)

    # Buffers from the wrapper + deterministic synthetic head weights.
    image_mean = jnp.array([0.485, 0.456, 0.406], dtype=jnp.float32)
    image_std = jnp.array([0.229, 0.224, 0.225], dtype=jnp.float32)
    head_w = jnp.array([0.25, 0.5, 0.25], dtype=jnp.float32)
    head_b = jnp.array([0.1], dtype=jnp.float32)

    fwd = jax.jit(gcagc_cosal_forward)
    out = jax.block_until_ready(fwd(x, head_w, head_b, image_mean, image_std))

    ref = _reference_forward(x, head_w, head_b, image_mean, image_std)
    assert out.shape == (2, 1, 16, 16)
    assert jnp.allclose(out, ref, atol=1e-5), "mismatch vs pure-JAX reference"

    print("KERNEL_OK")
</pallas_src>

<mosaic_0001>
module attributes {stable_mosaic.version = 11 : i64} {
  func.func @_head_kernel(%arg0: i32, %arg1: i32, %arg2: memref<3xf32, #tpu.memory_space<smem>>, %arg3: memref<1xf32, #tpu.memory_space<smem>>, %arg4: memref<1x3x256xf32, #tpu.memory_space<vmem>>, %arg5: memref<1x1x256xf32, #tpu.memory_space<vmem>>, %arg6: memref<1x1x1x128xf32, #tpu.memory_space<vmem>>, %arg7: memref<1x1x1x128xf32, #tpu.memory_space<vmem>>) attributes {dimension_semantics = [#tpu.dimension_semantics<parallel>, #tpu.dimension_semantics<parallel>], iteration_bounds = array<i64: 2, 1>, scalar_prefetch = 0 : i64, scratch_operands = 0 : i64, tpu.core_type = #tpu.core_type<tc>, window_params = [{transform_indices = @transform_0, window_bounds = array<i64: 3>}, {transform_indices = @transform_1, window_bounds = array<i64: 1>}, {transform_indices = @transform_2, window_bounds = array<i64: 1, 3, 256>}, {transform_indices = @transform_3, window_bounds = array<i64: 1, 1, 256>}, {transform_indices = @transform_4, window_bounds = array<i64: 1, 1, 1, 128>}, {transform_indices = @transform_5, window_bounds = array<i64: 1, 1, 1, 128>}]} {
    %c0 = arith.constant 0 : index
    %c0_0 = arith.constant 0 : index
    %c0_1 = arith.constant 0 : index
    %0 = vector.load %arg4[%c0, %c0_0, %c0_1] : memref<1x3x256xf32, #tpu.memory_space<vmem>>, vector<1x3x256xf32>
    %1 = vector.shape_cast %0 : vector<1x3x256xf32> to vector<3x256xf32>
    %c0_2 = arith.constant 0 : index
    %2 = memref.load %arg2[%c0_2] : memref<3xf32, #tpu.memory_space<smem>>
    %3 = vector.extract_strided_slice %1 {offsets = [0, 0], sizes = [1, 256], strides = [1, 1]} : vector<3x256xf32> to vector<1x256xf32>
    %4 = vector.shape_cast %3 : vector<1x256xf32> to vector<256xf32>
    %5 = vector.broadcast %2 : f32 to vector<256xf32>
    %6 = arith.mulf %5, %4 : vector<256xf32>
    %c1 = arith.constant 1 : index
    %7 = memref.load %arg2[%c1] : memref<3xf32, #tpu.memory_space<smem>>
    %8 = vector.extract_strided_slice %1 {offsets = [1, 0], sizes = [1, 256], strides = [1, 1]} : vector<3x256xf32> to vector<1x256xf32>
    %9 = vector.shape_cast %8 : vector<1x256xf32> to vector<256xf32>
    %10 = vector.broadcast %7 : f32 to vector<256xf32>
    %11 = arith.mulf %10, %9 : vector<256xf32>
    %12 = arith.addf %6, %11 : vector<256xf32>
    %c2 = arith.constant 2 : index
    %13 = memref.load %arg2[%c2] : memref<3xf32, #tpu.memory_space<smem>>
    %14 = vector.extract_strided_slice %1 {offsets = [2, 0], sizes = [1, 256], strides = [1, 1]} : vector<3x256xf32> to vector<1x256xf32>
    %15 = vector.shape_cast %14 : vector<1x256xf32> to vector<256xf32>
    %16 = vector.broadcast %13 : f32 to vector<256xf32>
    %17 = arith.mulf %16, %15 : vector<256xf32>
    %18 = arith.addf %12, %17 : vector<256xf32>
    %c0_3 = arith.constant 0 : index
    %19 = memref.load %arg3[%c0_3] : memref<1xf32, #tpu.memory_space<smem>>
    %20 = vector.broadcast %19 : f32 to vector<256xf32>
    %21 = arith.addf %18, %20 : vector<256xf32>
    %22 = vector.shape_cast %21 : vector<256xf32> to vector<1x256xf32>
    %c0_4 = arith.constant 0 : index
    %c0_5 = arith.constant 0 : index
    %c0_6 = arith.constant 0 : index
    %23 = vector.load %arg5[%c0_4, %c0_5, %c0_6] : memref<1x1x256xf32, #tpu.memory_space<vmem>>, vector<1x1x256xf32>
    %24 = vector.shape_cast %23 : vector<1x1x256xf32> to vector<1x256xf32>
    %25 = vector.shape_cast %22 : vector<1x256xf32> to vector<1x1x256xf32>
    tpu.vector_store %arg5[%c0_4, %c0_5, %c0_6], %25 {strides = array<i32>} : memref<1x1x256xf32, #tpu.memory_space<vmem>>, vector<1x1x256xf32>,
    %cst = arith.constant dense<0x7F800000> : vector<1xf32>
    %26 = vector.multi_reduction <minimumf>, %22, %cst [1] : vector<1x256xf32> to vector<1xf32>
    %27 = vector.shape_cast %26 : vector<1xf32> to vector<1x1xf32>
    %28 = vector.shape_cast %27 : vector<1x1xf32> to vector<1x1xf32>
    %29 = vector.broadcast %28 : vector<1x1xf32> to vector<1x128xf32>
    %c0_7 = arith.constant 0 : index
    %c0_8 = arith.constant 0 : index
    %c0_9 = arith.constant 0 : index
    %c0_10 = arith.constant 0 : index
    %30 = vector.load %arg6[%c0_7, %c0_8, %c0_9, %c0_10] : memref<1x1x1x128xf32, #tpu.memory_space<vmem>>, vector<1x1x1x128xf32>
    %31 = vector.shape_cast %30 : vector<1x1x1x128xf32> to vector<1x128xf32>
    %32 = vector.shape_cast %29 : vector<1x128xf32> to vector<1x1x1x128xf32>
    tpu.vector_store %arg6[%c0_7, %c0_8, %c0_9, %c0_10], %32 {strides = array<i32>} : memref<1x1x1x128xf32, #tpu.memory_space<vmem>>, vector<1x1x1x128xf32>,
    %cst_11 = arith.constant dense<0xFF800000> : vector<1xf32>
    %33 = vector.multi_reduction <maximumf>, %22, %cst_11 [1] : vector<1x256xf32> to vector<1xf32>
    %34 = vector.shape_cast %33 : vector<1xf32> to vector<1x1xf32>
    %35 = vector.shape_cast %34 : vector<1x1xf32> to vector<1x1xf32>
    %36 = vector.broadcast %35 : vector<1x1xf32> to vector<1x128xf32>
    %c0_12 = arith.constant 0 : index
    %c0_13 = arith.constant 0 : index
    %c0_14 = arith.constant 0 : index
    %c0_15 = arith.constant 0 : index
    %37 = vector.load %arg7[%c0_12, %c0_13, %c0_14, %c0_15] : memref<1x1x1x128xf32, #tpu.memory_space<vmem>>, vector<1x1x1x128xf32>
    %38 = vector.shape_cast %37 : vector<1x1x1x128xf32> to vector<1x128xf32>
    %39 = vector.shape_cast %36 : vector<1x128xf32> to vector<1x1x1x128xf32>
    tpu.vector_store %arg7[%c0_12, %c0_13, %c0_14, %c0_15], %39 {strides = array<i32>} : memref<1x1x1x128xf32, #tpu.memory_space<vmem>>, vector<1x1x1x128xf32>,
    return
  }
  func.func @transform_0(%arg0: i32, %arg1: i32) -> i32 {
    %c0_i32 = arith.constant 0 : i32
    %c0_i32_0 = arith.constant 0 : i32
    return %c0_i32 : i32
  }
  func.func @transform_1(%arg0: i32, %arg1: i32) -> i32 {
    %c0_i32 = arith.constant 0 : i32
    %c0_i32_0 = arith.constant 0 : i32
    return %c0_i32 : i32
  }
  func.func @transform_2(%arg0: i32, %arg1: i32) -> (i32, i32, i32) {
    %c0_i32 = arith.constant 0 : i32
    %c0_i32_0 = arith.constant 0 : i32
    return %arg0, %c0_i32, %arg1 : i32, i32, i32
  }
  func.func @transform_3(%arg0: i32, %arg1: i32) -> (i32, i32, i32) {
    %c0_i32 = arith.constant 0 : i32
    %c0_i32_0 = arith.constant 0 : i32
    return %arg0, %c0_i32, %arg1 : i32, i32, i32
  }
  func.func @transform_4(%arg0: i32, %arg1: i32) -> (i32, i32, i32, i32) {
    %c0_i32 = arith.constant 0 : i32
    %c0_i32_0 = arith.constant 0 : i32
    %c0_i32_1 = arith.constant 0 : i32
    return %arg0, %arg1, %c0_i32, %c0_i32_0 : i32, i32, i32, i32
  }
  func.func @transform_5(%arg0: i32, %arg1: i32) -> (i32, i32, i32, i32) {
    %c0_i32 = arith.constant 0 : i32
    %c0_i32_0 = arith.constant 0 : i32
    %c0_i32_1 = arith.constant 0 : i32
    return %arg0, %arg1, %c0_i32, %c0_i32_0 : i32, i32, i32, i32
  }
}

module attributes {stable_mosaic.version = 11 : i64} {
  func.func @_normalize_kernel(%arg0: i32, %arg1: memref<1xf32, #tpu.memory_space<smem>>, %arg2: memref<1xf32, #tpu.memory_space<smem>>, %arg3: memref<4x128xf32, #tpu.memory_space<vmem>>, %arg4: memref<4x128xf32, #tpu.memory_space<vmem>>) attributes {dimension_semantics = [#tpu.dimension_semantics<parallel>], iteration_bounds = array<i64: 1>, scalar_prefetch = 0 : i64, scratch_operands = 0 : i64, tpu.core_type = #tpu.core_type<tc>, window_params = [{transform_indices = @transform_0, window_bounds = array<i64: 1>}, {transform_indices = @transform_1, window_bounds = array<i64: 1>}, {transform_indices = @transform_2, window_bounds = array<i64: 4, 128>}, {transform_indices = @transform_3, window_bounds = array<i64: 4, 128>}]} {
    %c0 = arith.constant 0 : index
    %c0_0 = arith.constant 0 : index
    %0 = vector.load %arg3[%c0, %c0_0] : memref<4x128xf32, #tpu.memory_space<vmem>>, vector<4x128xf32>
    %c0_1 = arith.constant 0 : index
    %1 = memref.load %arg1[%c0_1] : memref<1xf32, #tpu.memory_space<smem>>
    %2 = vector.broadcast %1 : f32 to vector<4x128xf32>
    %3 = arith.subf %0, %2 : vector<4x128xf32>
    %c0_2 = arith.constant 0 : index
    %4 = memref.load %arg2[%c0_2] : memref<1xf32, #tpu.memory_space<smem>>
    %5 = vector.broadcast %4 : f32 to vector<4x128xf32>
    %6 = arith.mulf %3, %5 : vector<4x128xf32>
    %c0_3 = arith.constant 0 : index
    %c0_4 = arith.constant 0 : index
    %7 = vector.load %arg4[%c0_3, %c0_4] : memref<4x128xf32, #tpu.memory_space<vmem>>, vector<4x128xf32>
    tpu.vector_store %arg4[%c0_3, %c0_4], %6 {strides = array<i32>} : memref<4x128xf32, #tpu.memory_space<vmem>>, vector<4x128xf32>,
    return
  }
  func.func @transform_0(%arg0: i32) -> i32 {
    %c0_i32 = arith.constant 0 : i32
    %c0_i32_0 = arith.constant 0 : i32
    return %c0_i32 : i32
  }
  func.func @transform_1(%arg0: i32) -> i32 {
    %c0_i32 = arith.constant 0 : i32
    %c0_i32_0 = arith.constant 0 : i32
    return %c0_i32 : i32
  }
  func.func @transform_2(%arg0: i32) -> (i32, i32) {
    %c0_i32 = arith.constant 0 : i32
    %c0_i32_0 = arith.constant 0 : i32
    return %arg0, %c0_i32 : i32, i32
  }
  func.func @transform_3(%arg0: i32) -> (i32, i32) {
    %c0_i32 = arith.constant 0 : i32
    %c0_i32_0 = arith.constant 0 : i32
    return %arg0, %c0_i32 : i32, i32
  }
}

</mosaic_0001>

<llo_original>
// kernel: gcagc_cosal_forward.3
$region0: #{gcagc_cosal_forward.3}
  #allocation0 [shape = 'u32[]', space=smem, size = 0x4, offset = 0x4, fixed_abs, tag = 'smem constant byte address 0x4 - core index']
  #allocation1 [shape = 'u32[144,128]{1,0:T(1,128)}', space=vmem, size = 0x12000, scoped, tag = 'internal scratch']
  #allocation2 [shape = 'f32[1]{0:T(128)S(6)}', space=smem, size = 0x200, scoped, tag = 'scoped memory for gcagc_cosal_forward.3']
  #allocation3 [shape = 'f32[1]{0:T(128)S(6)}', space=smem, size = 0x200, scoped, tag = 'scoped memory for gcagc_cosal_forward.3']
  %s0 = inlined_call_operand.<no memory space> [shape: f32[1], index: 0, kind: input, shape index: {}]
  %s1 = inlined_call_operand.<no memory space> [shape: f32[1], index: 1, kind: input, shape index: {}]
  %s2 = inlined_call_operand.vmem [shape: f32[4,128], index: 2, kind: input, shape index: {}, may-alias: {2,3}]
  %s3 = inlined_call_operand.vmem [shape: f32[4,128], index: 3, kind: output, shape index: {}, may-alias: {2,3}]
  %s4 = sld [smem:[#allocation0]]
  $region22: #{gcagc_cosal_forward.3} parent=0
    _
  %s6 = ssub.s32 1, %s4
  %s7 = scalar_select 0, %s6, %s4
  %8 = sst [smem:[#allocation2]] %s0
  %9 = sst [smem:[#allocation3]] %s1
  // Predicated region
  $region2: #{gcagc_cosal_forward.3} parent=0 // pred_check
    _
  $region3: #{gcagc_cosal_forward.3} parent=0 // pred_check_branch
    %11 = sbr.rel (0) target = $region5
  $region4: #{gcagc_cosal_forward.3} parent=0 // pred_region
    _
  $region5: #{gcagc_cosal_forward.3} parent=0 // pred_fallthru
    _
  // Predicated region
  $region6: #{gcagc_cosal_forward.3} parent=0 // pred_check
    _
  $region7: #{gcagc_cosal_forward.3} parent=0 // pred_check_branch
    %13 = sbr.rel (0) target = $region9
  $region8: #{gcagc_cosal_forward.3} parent=0 // pred_region
    _
  $region9: #{gcagc_cosal_forward.3} parent=0 // pred_fallthru
    _
  // Predicated region
  $region10: #{gcagc_cosal_forward.3} parent=0 // pred_check
    _
  $region11: #{gcagc_cosal_forward.3} parent=0 // pred_check_branch
    %15 = sbr.rel (0) target = $region13
  $region12: #{gcagc_cosal_forward.3} parent=0 // pred_region
    _
  $region13: #{gcagc_cosal_forward.3} parent=0 // pred_fallthru
    _
  %v16 = vld [vmem:[%s2] sm:$0xf]
  %s17 = sld [smem:[#allocation2]]
  %v18 = vstv %s17
  %v19 = vsub.f32 %v16, %v18
  %s20 = sld [smem:[#allocation3]]
  %v21 = vstv %s20
  %v22 = vmul.f32 %v19, %v21
  %23 = vst [vmem:[%s3] sm:$0xf] %v22
  // Predicated region
  $region14: #{gcagc_cosal_forward.3} parent=0 // pred_check
    _
  $region15: #{gcagc_cosal_forward.3} parent=0 // pred_check_branch
    %25 = sbr.rel (0) target = $region17
  $region16: #{gcagc_cosal_forward.3} parent=0 // pred_region
    _
  $region17: #{gcagc_cosal_forward.3} parent=0 // pred_fallthru
    _
  // Predicated region
  $region18: #{gcagc_cosal_forward.3} parent=0 // pred_check
    _
  $region19: #{gcagc_cosal_forward.3} parent=0 // pred_check_branch
    %27 = sbr.rel (0) target = $region21
  $region20: #{gcagc_cosal_forward.3} parent=0 // pred_region
    _
  $region21: #{gcagc_cosal_forward.3} parent=0 // pred_fallthru
    _

// kernel: gcagc_cosal_forward.2
$region0: #{gcagc_cosal_forward.2}
  #allocation0 [shape = 'u32[]', space=smem, size = 0x4, offset = 0x4, fixed_abs, tag = 'smem constant byte address 0x4 - core index']
  #allocation1 [shape = 'u32[144,128]{1,0:T(1,128)}', space=vmem, size = 0x12000, scoped, tag = 'internal scratch']
  #allocation2 [shape = 'f32[1]{0:T(128)S(6)}', space=smem, size = 0x200, scoped, tag = 'scoped memory for gcagc_cosal_forward.2']
  %s0 = inlined_call_operand.vmem [shape: f32[3], index: 0, kind: input, shape index: {}]
  %s1 = inlined_call_operand.<no memory space> [shape: f32[1], index: 1, kind: input, shape index: {}]
  %s2 = inlined_call_operand.vmem [shape: f32[2,3,256], index: 2, kind: input, shape index: {}]
  %s3 = inlined_call_operand.vmem [shape: f32[2,1,256], index: 3, kind: output, shape index: {0}]
  %s4 = inlined_call_operand.vmem [shape: f32[2,1,1,128], index: 4, kind: output, shape index: {1}]
  %s5 = inlined_call_operand.vmem [shape: f32[2,1,1,128], index: 5, kind: output, shape index: {2}]
  %6 = xla_tuple %s3, %s4, %s5
  %s7 = sld [smem:[#allocation0]]
  $region65: #{gcagc_cosal_forward.2} parent=0
    _
  %s9 = ssub.s32 1, %s7
  %s10 = scalar_select 0, %s9, %s7
  %11 = sst [smem:[#allocation2]] %s1
  $region1: #{gcagc_cosal_forward.2} parent=0
    #allocation3 [shape = 'u8[512]{0}', space=smem, size = 0x200, scoped, tag = 'input window, operand 0, single buffered']
    #allocation4 [shape = 's32[2]{0}', space=sflag, size = 0x8, scoped, tag = 'scoped memory for gcagc_cosal_forward.2']
    %12 = vsyncpa [#allocation4], 0
    loop: start=0, step=1, limit=4
    $region2: #{gcagc_cosal_forward.2} parent=1 // loop_pre_header
      _
    $region3: #{gcagc_cosal_forward.2} parent=1 // loop_header
      %s14 = sphi 0, %s18
      %p15 = scmp.ge.s32.totalorder %s14, 4
      %s21 = sphi 0, %s33
      %s22 = sphi 0, %s29
      %s23 = sphi 0, %s21
      %s24 = sphi 0, %s22
      %s25 = sphi 0, %s23
      %s26 = sphi 0, %s24
      %s34 = sphi 0, %s34
      %s36 = sphi 0, %s34
      %s37 = sphi 0, %s36
      %s51 = sphi 0, %s37
      %s55 = sphi 0, %s55
      %s57 = sphi 0, %s55
      %s58 = sphi 0, %s57
      %s72 = sphi 0, %s58
      %s80 = sphi 0, %s82
      %s83 = sphi 0, %s80
      %s84 = sphi 0, %s83
      %s100 = sphi 0, %s84
      %s108 = sphi 0, %s110
      %s111 = sphi 0, %s108
      %s112 = sphi 0, %s111
      %s128 = sphi 0, %s112
      %s136 = sphi 0, %s138
      %s139 = sphi 0, %s136
      %s140 = sphi 0, %s139
      %s156 = sphi 0, %s140
      %s164 = sphi 0, %s166
      %s167 = sphi 0, %s164
      %s168 = sphi 0, %s167
      %s184 = sphi 0, %s168
    $region4: #{gcagc_cosal_forward.2} parent=1 // loop_header_branch
      %17 = sbr.rel (%p15) target = $region8
    $region5: #{gcagc_cosal_forward.2} parent=1 // loop_body
      %s19 = ssub.s32 %s14, 1
      %s20 = ssub.s32 %s14, 2
      %s27 = sadd.s32 1, %s22
      %p28 = scmp.ge.s32.totalorder %s27, 1
      %s29 = scalar_select %p28, 0, %s27
      %s30 = sadd.s32 1, %s21
      %s31 = scalar_select %p28, %s30, %s21
      %p32 = scmp.ge.s32.totalorder %s31, 2
      %s33 = scalar_select %p32, 0, %s31
      %s35 = sadd.s32 %s34, 1
      %p38 = scmp.eq.s32.totalorder %s14, 1
      %p39 = scmp.ne.s32.totalorder %s34, %s36
      %p40 = scmp.eq.s32.totalorder %s14, 0
      %p41 = por %p39, %p40
      %p42 = scmp.ne.s32.totalorder %s34, %s36
      %p43 = scmp.eq.s32.totalorder %s19, 1
      %p44 = por %p42, %p43
      %p45 = scmp.ne.s32.totalorder %s36, %s37
      %p46 = scmp.eq.s32.totalorder %s19, 0
      %p47 = por %p45, %p46
      %p48 = scmp.ne.s32.totalorder %s36, %s37
      %p49 = scmp.eq.s32.totalorder %s20, 1
      %p50 = por %p48, %p49
      %p52 = scmp.ne.s32.totalorder %s37, %s51
      %p53 = scmp.eq.s32.totalorder %s20, 0
      %p54 = por %p52, %p53
      %s56 = sadd.s32 %s55, 1
      %p59 = scmp.eq.s32.totalorder %s14, 1
      %p60 = scmp.ne.s32.totalorder %s55, %s57
      %p61 = scmp.eq.s32.totalorder %s14, 0
      %p62 = por %p60, %p61
      %p63 = scmp.ne.s32.totalorder %s55, %s57
      %p64 = scmp.eq.s32.totalorder %s19, 1
      %p65 = por %p63, %p64
      %p66 = scmp.ne.s32.totalorder %s57, %s58
      %p67 = scmp.eq.s32.totalorder %s19, 0
      %p68 = por %p66, %p67
      %p69 = scmp.ne.s32.totalorder %s57, %s58
      %p70 = scmp.eq.s32.totalorder %s20, 1
      %p71 = por %p69, %p70
      %p73 = scmp.ne.s32.totalorder %s58, %s72
      %p74 = scmp.eq.s32.totalorder %s20, 0
      %p75 = por %p73, %p74
      %s76 = ssub.s32 %s21, %s33
      %s77 = ssub.s32 %s22, %s29
      %s78 = sor.u32 %s76, %s77
      %p79 = scmp.eq.s32.totalorder %s78, 0
      %s81 = sadd.s32 %s80, 1
      %s82 = scalar_select %p79, %s80, %s81
      %p85 = pneg %p79
      %p86 = scmp.eq.s32.totalorder %s14, 1
      %p87 = por %p85, %p86
      %p88 = scmp.ne.s32.totalorder %s80, %s83
      %p89 = scmp.eq.s32.totalorder %s14, 0
      %p90 = por %p88, %p89
      %p91 = scmp.ne.s32.totalorder %s80, %s83
      %p92 = scmp.eq.s32.totalorder %s19, 1
      %p93 = por %p91, %p92
      %p94 = scmp.ne.s32.totalorder %s83, %s84
      %p95 = scmp.eq.s32.totalorder %s19, 0
      %p96 = por %p94, %p95
      %p97 = scmp.ne.s32.totalorder %s83, %s84
      %p98 = scmp.eq.s32.totalorder %s20, 1
      %p99 = por %p97, %p98
      %p101 = scmp.ne.s32.totalorder %s84, %s100
      %p102 = scmp.eq.s32.totalorder %s20, 0
      %p103 = por %p101, %p102
      %s104 = ssub.s32 %s21, %s33
      %s105 = ssub.s32 %s22, %s29
      %s106 = sor.u32 %s104, %s105
      %p107 = scmp.eq.s32.totalorder %s106, 0
      %s109 = sadd.s32 %s108, 1
      %s110 = scalar_select %p107, %s108, %s109
      %p113 = pneg %p107
      %p114 = scmp.eq.s32.totalorder %s14, 1
      %p115 = por %p113, %p114
      %p116 = scmp.ne.s32.totalorder %s108, %s111
      %p117 = scmp.eq.s32.totalorder %s14, 0
      %p118 = por %p116, %p117
      %p119 = scmp.ne.s32.totalorder %s108, %s111
      %p120 = scmp.eq.s32.totalorder %s19, 1
      %p121 = por %p119, %p120
      %p122 = scmp.ne.s32.totalorder %s111, %s112
      %p123 = scmp.eq.s32.totalorder %s19, 0
      %p124 = por %p122, %p123
      %p125 = scmp.ne.s32.totalorder %s111, %s112
      %p126 = scmp.eq.s32.totalorder %s20, 1
      %p127 = por %p125, %p126
      %p129 = scmp.ne.s32.totalorder %s112, %s128
      %p130 = scmp.eq.s32.totalorder %s20, 0
      %p131 = por %p129, %p130
      %s132 = ssub.s32 %s21, %s33
      %s133 = ssub.s32 %s22, %s29
      %s134 = sor.u32 %s132, %s133
      %p135 = scmp.eq.s32.totalorder %s134, 0
      %s137 = sadd.s32 %s136, 1
      %s138 = scalar_select %p135, %s136, %s137
      %p141 = pneg %p135
      %p142 = scmp.eq.s32.totalorder %s14, 1
      %p143 = por %p141, %p142
      %p144 = scmp.ne.s32.totalorder %s136, %s139
      %p145 = scmp.eq.s32.totalorder %s14, 0
      %p146 = por %p144, %p145
      %p147 = scmp.ne.s32.totalorder %s136, %s139
      %p148 = scmp.eq.s32.totalorder %s19, 1
      %p149 = por %p147, %p148
      %p150 = scmp.ne.s32.totalorder %s139, %s140
      %p151 = scmp.eq.s32.totalorder %s19, 0
      %p152 = por %p150, %p151
      %p153 = scmp.ne.s32.totalorder %s139, %s140
      %p154 = scmp.eq.s32.totalorder %s20, 1
      %p155 = por %p153, %p154
      %p157 = scmp.ne.s32.totalorder %s140, %s156
      %p158 = scmp.eq.s32.totalorder %s20, 0
      %p159 = por %p157, %p158
      %s160 = ssub.s32 %s21, %s33
      %s161 = ssub.s32 %s22, %s29
      %s162 = sor.u32 %s160, %s161
      %p163 = scmp.eq.s32.totalorder %s162, 0
      %s165 = sadd.s32 %s164, 1
      %s166 = scalar_select %p163, %s164, %s165
      %p169 = pneg %p163
      %p170 = scmp.eq.s32.totalorder %s14, 1
      %p171 = por %p169, %p170
      %p172 = scmp.ne.s32.totalorder %s164, %s167
      %p173 = scmp.eq.s32.totalorder %s14, 0
      %p174 = por %p172, %p173
      %p175 = scmp.ne.s32.totalorder %s164, %s167
      %p176 = scmp.eq.s32.totalorder %s19, 1
      %p177 = por %p175, %p176
      %p178 = scmp.ne.s32.totalorder %s167, %s168
      %p179 = scmp.eq.s32.totalorder %s19, 0
      %p180 = por %p178, %p179
      %p181 = scmp.ne.s32.totalorder %s167, %s168
      %p182 = scmp.eq.s32.totalorder %s20, 1
      %p183 = por %p181, %p182
      %p185 = scmp.ne.s32.totalorder %s168, %s184
      %p186 = scmp.eq.s32.totalorder %s20, 0
      %p187 = por %p185, %p186
      %p188 = scmp.le.s32.totalorder 1, %s14
      %p189 = scmp.lt.s32.totalorder %s14, 3
      %p190 = pnand %p188, %p189
      %p191 = pneg %p190
      // Predicated region
      $region9: #{gcagc_cosal_forward.2} parent=5 // pred_check
        _
      $region10: #{gcagc_cosal_forward.2} parent=5 // pred_check_branch
        %193 = sbr.rel (%p190) target = $region12
      $region11: #{gcagc_cosal_forward.2} parent=5 // pred_region
        %s194 = ssub.s32 %s14, 1
        // Predicated region
        $region13: #{gcagc_cosal_forward.2} parent=11 // pred_check
          %p195 = pneg %p47
        $region14: #{gcagc_cosal_forward.2} parent=11 // pred_check_branch
          %197 = sbr.rel (%p195) target = $region16
        $region15: #{gcagc_cosal_forward.2} parent=11 // pred_region
          %s199 = ssub.s32 16, 16
          %200 = vsyncadd [#allocation4], %s199
          %s202 = sshll.u32 %s0, 4
          %s203 = int_to_ptr.vmem [resolvable:$true] %s202
          %205 = dma.vmem_to_smem %s203, 16, [#allocation3], [#allocation4]
        $region16: #{gcagc_cosal_forward.2} parent=11 // pred_fallthru
          _
        // Predicated region
        $region17: #{gcagc_cosal_forward.2} parent=11 // pred_check
          %p206 = pneg %p68
        $region18: #{gcagc_cosal_forward.2} parent=11 // pred_check_branch
          %208 = sbr.rel (%p206) target = $region20
        $region19: #{gcagc_cosal_forward.2} parent=11 // pred_region
          _
        $region20: #{gcagc_cosal_forward.2} parent=11 // pred_fallthru
          _
      $region12: #{gcagc_cosal_forward.2} parent=5 // pred_fallthru
        _
      %p209 = scmp.lt.s32.totalorder %s14, 2
      // Predicated region
      $region21: #{gcagc_cosal_forward.2} parent=5 // pred_check
        %p210 = pneg %p209
      $region22: #{gcagc_cosal_forward.2} parent=5 // pred_check_branch
        %212 = sbr.rel (%p210) target = $region24
      $region23: #{gcagc_cosal_forward.2} parent=5 // pred_region
        // Predicated region
        $region25: #{gcagc_cosal_forward.2} parent=23 // pred_check
          %p213 = pneg %p90
        $region26: #{gcagc_cosal_forward.2} parent=23 // pred_check_branch
          %215 = sbr.rel (%p213) target = $region28
        $region27: #{gcagc_cosal_forward.2} parent=23 // pred_region
          %s216 = smul.u32 2, %s22
          %p217 = scmp.lt.s32.totalorder %s21, 1
          %s218 = scalar_select %p217, %s21, 1
          %p219 = scmp.lt.s32.totalorder %s216, 1
          %s220 = scalar_select %p219, %s216, 1
          %s221 = smul.addr %s218, 2
          %s222 = sadd.s32 %s220, %s221
          %s223 = smul.addr %s222, 4
          %s224 = scalar_lea.vmem %s2, %s223
          %s225 = smul.u32 2, %s22
        $region28: #{gcagc_cosal_forward.2} parent=23 // pred_fallthru
          _
      $region24: #{gcagc_cosal_forward.2} parent=5 // pred_fallthru
        _
      %p226 = scmp.le.s32.totalorder 1, %s14
      %p227 = scmp.lt.s32.totalorder %s14, 3
      %p228 = pnand %p226, %p227
      %p229 = pneg %p228
      // Predicated region
      $region29: #{gcagc_cosal_forward.2} parent=5 // pred_check
        _
      $region30: #{gcagc_cosal_forward.2} parent=5 // pred_check_branch
        %231 = sbr.rel (%p228) target = $region32
      $region31: #{gcagc_cosal_forward.2} parent=5 // pred_region
        %s232 = ssub.s32 %s14, 1
        // Predicated region
        $region33: #{gcagc_cosal_forward.2} parent=31 // pred_check
          %p233 = pneg %p47
        $region34: #{gcagc_cosal_forward.2} parent=31 // pred_check_branch
          %235 = sbr.rel (%p233) target = $region36
        $region35: #{gcagc_cosal_forward.2} parent=31 // pred_region
          %236 = dma.done [#allocation4], 16
        $region36: #{gcagc_cosal_forward.2} parent=31 // pred_fallthru
          _
        %237 = sfence
        %p238 = pneg %p47
        %p239 = pneg %p44
        %p240 = pneg %p68
        %p241 = pneg %p65
        %s242 = smul.u32 2, %s24
        %p243 = scmp.lt.s32.totalorder %s23, 1
        %s244 = scalar_select %p243, %s23, 1
        %p245 = scmp.lt.s32.totalorder %s242, 1
        %s246 = scalar_select %p245, %s242, 1
        %s247 = smul.addr %s244, 2
        %s248 = sadd.s32 %s246, %s247
        %s249 = smul.addr %s248, 4
        %s250 = scalar_lea.vmem %s2, %s249
        %p251 = pneg %p96
        %p252 = pneg %p93
        %p253 = pneg %p124
        %p254 = pneg %p121
        %s255 = smul.u32 2, %s24
        %p256 = scmp.lt.s32.totalorder %s23, 1
        %s257 = scalar_select %p256, %s23, 1
        %p258 = scmp.lt.s32.totalorder %s255, 1
        %s259 = scalar_select %p258, %s255, 1
        %s260 = smul.addr %s257, 2
        %s261 = sadd.s32 %s259, %s260
        %s262 = scalar_lea.vmem %s3, %s261
        %p263 = pneg %p152
        %p264 = pneg %p149
        %p265 = scmp.lt.s32.totalorder %s23, 1
        %s266 = scalar_select %p265, %s23, 1
        %p267 = scmp.lt.s32.totalorder %s24, 0
        %s268 = scalar_select %p267, %s24, 0
        %s269 = sadd.s32 %s268, %s266
        %s270 = scalar_lea.vmem %s4, %s269
        %p271 = pneg %p180
        %p272 = pneg %p177
        %p273 = scmp.lt.s32.totalorder %s23, 1
        %s274 = scalar_select %p273, %s23, 1
        %p275 = scmp.lt.s32.totalorder %s24, 0
        %s276 = scalar_select %p275, %s24, 0
        %s277 = sadd.s32 %s276, %s274
        %s278 = scalar_lea.vmem %s5, %s277
        %s279 = smul.u32 2, %s24
        %p280 = scmp.lt.s32.totalorder %s23, 1
        %s281 = scalar_select %p280, %s23, 1
        %p282 = scmp.lt.s32.totalorder %s279, 1
        %s283 = scalar_select %p282, %s279, 1
        %s284 = smul.addr %s281, 2
        %s285 = sadd.s32 %s283, %s284
        %s286 = smul.addr %s285, 4
        %s287 = scalar_lea.vmem %s2, %s286
        %s288 = smul.u32 2, %s24
        %s289 = smul.u32 2, %s24
        %p290 = scmp.lt.s32.totalorder %s23, 1
        %s291 = scalar_select %p290, %s23, 1
        %p292 = scmp.lt.s32.totalorder %s289, 1
        %s293 = scalar_select %p292, %s289, 1
        %s294 = smul.addr %s291, 2
        %s295 = sadd.s32 %s293, %s294
        %s296 = scalar_lea.vmem %s3, %s295
        %s297 = smul.u32 2, %s24
        %p298 = scmp.lt.s32.totalorder %s23, 1
        %s299 = scalar_select %p298, %s23, 1
        %p300 = scmp.lt.s32.totalorder %s24, 0
        %s301 = scalar_select %p300, %s24, 0
        %s302 = sadd.s32 %s301, %s299
        %s303 = scalar_lea.vmem %s4, %s302
        %p304 = scmp.lt.s32.totalorder %s23, 1
        %s305 = scalar_select %p304, %s23, 1
        %p306 = scmp.lt.s32.totalorder %s24, 0
        %s307 = scalar_select %p306, %s24, 0
        %s308 = sadd.s32 %s307, %s305
        %s309 = scalar_lea.vmem %s5, %s308
        %v310 = vld [vmem:[%s287] sm:$0x77]
        %s311 = sld [smem:[#allocation3]]
        %v312 = vstv %s311
        %v313 = vmul.f32 %v312, %v310
        %s314 = sld [smem:[#allocation3 + $0x1]]
        %v315 = vstv %s314
        %v316 = vmul.f32 %v315, %v310
        %v318 = vrot.slane %v316, 5
        %v319 = vrot.slane %v318, 4
        %v321 = vadd.f32 %v313, %v319
        %s322 = sld [smem:[#allocation3 + $0x2]]
        %v323 = vstv %s322
        %v324 = vmul.f32 %v323, %v310
        %v326 = vrot.slane %v324, 6
        %v327 = vrot.slane %v326, 4
        %v329 = vadd.f32 %v321, %v327
        %s330 = sld [smem:[#allocation2]]
        %v331 = vstv %s330
        %v332 = vadd.f32 %v329, %v331
        %v335 = vunpack.c.l.s4 1966171168
        %v336 = vunpack.c.0.s8 %v335
        %v337 = vlaneseq
        %v338 = vshrl.u32 %v337, 7
        %v339 = vsub.s32 %v336, %v338
        %v340 = vrot.slane %v332, %v339
        %v342 = vunpack.c.l.s4 1966171168
        %v343 = vunpack.c.0.s8 %v342
        %v344 = vlaneseq
        %v345 = vshrl.u32 %v344, 7
        %v346 = vsub.s32 %v343, %v345
        %v347 = vrot.slane %v340, %v346
        %v349 = vlaneseq
        %vm350 = vcmp.ge.s32.totalorder %v349, 0
        %vm351 = vcmp.lt.s32.totalorder %v349, 256
        %vm352 = vmand %vm350, %vm351
        %353 = vst.msk [vmem:[%s296] sm:$0x3] %vm352, %v347
        %v354 = vlaneseq
        %v355 = vshrl.u32 %v354, 7
        %v356 = vsub.s32 0, %v355
        %v357 = vrot.slane %v332, %v356
        %v358 = vlaneseq
        %v359 = vshrl.u32 %v358, 7
        %v360 = vsub.s32 4, %v359
        %v361 = vrot.slane %v332, %v360
        %vm364 = vcmask 1040384
        %v365 = vsel %vm364, %v357, inf
        %v366 = vsel %vm364, %v361, inf
        %v367 = vmin.f32 %v365, %v366
        %368 = vmin.xlane.f32.xlu0 %v367
        %v369 = vpop.xlane.xlu0 %368
        %370 = vst [vmem:[%s303] sm:$0x1] %v369
        %v371 = vsel %vm364, %v357, -inf
        %v372 = vsel %vm364, %v361, -inf
        %v373 = vmax.f32 %v371, %v372
        %374 = vmax.xlane.f32.xlu0 %v373
        %v375 = vpop.xlane.xlu0 %374
        %376 = vst [vmem:[%s309] sm:$0x1] %v375
        %s377 = smul.u32 2, %s24
        %p378 = scmp.lt.s32.totalorder %s23, 1
        %s379 = scalar_select %p378, %s23, 1
        %p380 = scmp.lt.s32.totalorder %s377, 1
        %s381 = scalar_select %p380, %s377, 1
        %s382 = smul.addr %s379, 2
        %s383 = sadd.s32 %s381, %s382
        %s384 = scalar_lea.vmem %s3, %s383
        %p385 = scmp.lt.s32.totalorder %s23, 1
        %s386 = scalar_select %p385, %s23, 1
        %p387 = scmp.lt.s32.totalorder %s24, 0
        %s388 = scalar_select %p387, %s24, 0
        %s389 = sadd.s32 %s388, %s386
        %s390 = scalar_lea.vmem %s4, %s389
        %p391 = scmp.lt.s32.totalorder %s23, 1
        %s392 = scalar_select %p391, %s23, 1
        %p393 = scmp.lt.s32.totalorder %s24, 0
        %s394 = scalar_select %p393, %s24, 0
        %s395 = sadd.s32 %s394, %s392
        %s396 = scalar_lea.vmem %s5, %s395
        // Predicated region
        $region37: #{gcagc_cosal_forward.2} parent=31 // pred_check
          %p397 = pneg %p121
        $region38: #{gcagc_cosal_forward.2} parent=31 // pred_check_branch
          %399 = sbr.rel (%p397) target = $region40
        $region39: #{gcagc_cosal_forward.2} parent=31 // pred_region
          %s400 = smul.u32 2, %s24
        $region40: #{gcagc_cosal_forward.2} parent=31 // pred_fallthru
          _
        // Predicated region
        $region41: #{gcagc_cosal_forward.2} parent=31 // pred_check
          %p401 = pneg %p149
        $region42: #{gcagc_cosal_forward.2} parent=31 // pred_check_branch
          %403 = sbr.rel (%p401) target = $region44
        $region43: #{gcagc_cosal_forward.2} parent=31 // pred_region
          _
        $region44: #{gcagc_cosal_forward.2} parent=31 // pred_fallthru
          _
        // Predicated region
        $region45: #{gcagc_cosal_forward.2} parent=31 // pred_check
          %p404 = pneg %p177
        $region46: #{gcagc_cosal_forward.2} parent=31 // pred_check_branch
          %406 = sbr.rel (%p404) target = $region48
        $region47: #{gcagc_cosal_forward.2} parent=31 // pred_region
          _
        $region48: #{gcagc_cosal_forward.2} parent=31 // pred_fallthru
          _
      $region32: #{gcagc_cosal_forward.2} parent=5 // pred_fallthru
        _
      %p407 = scmp.le.s32.totalorder 2, %s14
      // Predicated region
      $region49: #{gcagc_cosal_forward.2} parent=5 // pred_check
        %p408 = pneg %p407
      $region50: #{gcagc_cosal_forward.2} parent=5 // pred_check_branch
        %410 = sbr.rel (%p408) target = $region52
      $region51: #{gcagc_cosal_forward.2} parent=5 // pred_region
        %s411 = ssub.s32 %s14, 2
        // Predicated region
        $region53: #{gcagc_cosal_forward.2} parent=51 // pred_check
          %p412 = pneg %p127
        $region54: #{gcagc_cosal_forward.2} parent=51 // pred_check_branch
          %414 = sbr.rel (%p412) target = $region56
        $region55: #{gcagc_cosal_forward.2} parent=51 // pred_region
          %s415 = smul.u32 2, %s26
          %p416 = scmp.lt.s32.totalorder %s25, 1
          %s417 = scalar_select %p416, %s25, 1
          %p418 = scmp.lt.s32.totalorder %s415, 1
          %s419 = scalar_select %p418, %s415, 1
          %s420 = smul.addr %s417, 2
          %s421 = sadd.s32 %s419, %s420
          %s422 = scalar_lea.vmem %s3, %s421
        $region56: #{gcagc_cosal_forward.2} parent=51 // pred_fallthru
          _
        // Predicated region
        $region57: #{gcagc_cosal_forward.2} parent=51 // pred_check
          %p423 = pneg %p155
        $region58: #{gcagc_cosal_forward.2} parent=51 // pred_check_branch
          %425 = sbr.rel (%p423) target = $region60
        $region59: #{gcagc_cosal_forward.2} parent=51 // pred_region
          %p426 = scmp.lt.s32.totalorder %s25, 1
          %s427 = scalar_select %p426, %s25, 1
          %p428 = scmp.lt.s32.totalorder %s26, 0
          %s429 = scalar_select %p428, %s26, 0
          %s430 = sadd.s32 %s429, %s427
          %s431 = scalar_lea.vmem %s4, %s430
        $region60: #{gcagc_cosal_forward.2} parent=51 // pred_fallthru
          _
        // Predicated region
        $region61: #{gcagc_cosal_forward.2} parent=51 // pred_check
          %p432 = pneg %p183
        $region62: #{gcagc_cosal_forward.2} parent=51 // pred_check_branch
          %434 = sbr.rel (%p432) target = $region64
        $region63: #{gcagc_cosal_forward.2} parent=51 // pred_region
          %p435 = scmp.lt.s32.totalorder %s25, 1
          %s436 = scalar_select %p435, %s25, 1
          %p437 = scmp.lt.s32.totalorder %s26, 0
          %s438 = scalar_select %p437, %s26, 0
          %s439 = sadd.s32 %s438, %s436
          %s440 = scalar_lea.vmem %s5, %s439
        $region64: #{gcagc_cosal_forward.2} parent=51 // pred_fallthru
          _
      $region52: #{gcagc_cosal_forward.2} parent=5 // pred_fallthru
        _
    $region6: #{gcagc_cosal_forward.2} parent=1 // loop_footer
      %s18 = sadd.s32 1, %s14
    $region7: #{gcagc_cosal_forward.2} parent=1 // loop_footer_branch
      %13 = sbr.rel target = $region3
    $region8: #{gcagc_cosal_forward.2} parent=1 // loop_exit
      _
    %441 = vsyncpa [#allocation4], 1
    %s442 = scalar_lea.sflag [#allocation4], 1
    %443 = vsyncpa %s442, 1

</llo_original>
